<compile_context>
chip_gen: v5e
topology: v5e:2x2
jax: 0.10.0
libtpu: 0.0.40
codegen_flags: <defaults>
</compile_context>

<pallas_src>
import functools

import jax
import jax.numpy as jnp
from jax import lax
from jax.experimental import pallas as pl
from jax.experimental.pallas import tpu as pltpu


def _sepconv_kernel(xf_ref, b_ref, o_ref, *, K, stride, tH, WoC):
    """One (batch, output-row-tile) per grid step.

    xf_ref: (1, Hp, Wp*Cin)        zero-padded input, W and Cin folded on lanes
    b_ref : (K, Wp*Cin, Wo*Cout)   fused (depthwise x pointwise) banded weights
    o_ref : (1, tH, Wo*Cout)       lane-dense output tile
    """
    r = pl.program_id(1)
    row0 = pl.multiple_of(r * (tH * stride), tH * stride)

    acc = jnp.zeros((tH, WoC), jnp.float32)
    for kh in range(K):  # short, static: fully unrolled
        if stride == 1:
            rows = xf_ref[0, pl.ds(row0 + kh, tH), :]
        else:
            span = (tH - 1) * stride + 1
            rows = xf_ref[0, pl.ds(row0 + kh, span), :][::stride]
        acc = acc + jnp.dot(rows, b_ref[kh], preferred_element_type=jnp.float32)

    o_ref[...] = acc.reshape(1, tH, WoC).astype(o_ref.dtype)


def _pick_row_tile(Ho, row_tile=None, max_rows=64):
    """Row tile must divide Ho and be a multiple of 8 (or equal Ho)."""
    if row_tile is not None and Ho % row_tile == 0 and (row_tile % 8 == 0 or row_tile == Ho):
        return row_tile
    cands = [t for t in range(8, min(Ho, max_rows) + 1, 8) if Ho % t == 0]
    return max(cands) if cands else Ho


def _build_banded_weight(dw, pw, *, Wp, Wo, stride):
    """Fuse depthwise + pointwise weights into K banded (Wp*Cin, Wo*Cout) mats.

    dw: (K, K, Cin)  depthwise filter (kh, kw, cin)
    pw: (Cin, Cout)  pointwise filter
    returns B: (K, Wp*Cin, Wo*Cout) with
      B[kh, w*Cin+cin, wo*Cout+cout] = dw[kh, w - wo*stride, cin] * pw[cin, cout]
      (zero where w - wo*stride is outside [0, K)).
    """
    K, _, Cin = dw.shape
    Cout = pw.shape[1]
    w_idx = jnp.arange(Wp)[:, None]                    # (Wp, 1)
    wo_idx = jnp.arange(Wo)[None, :]                   # (1, Wo)
    kw = w_idx - wo_idx * stride                       # (Wp, Wo)
    valid = (kw >= 0) & (kw < K)
    kw_c = jnp.clip(kw, 0, K - 1)
    d = dw[:, kw_c, :]                                 # (K, Wp, Wo, Cin)
    d = d * valid[None, :, :, None].astype(dw.dtype)
    b = d[:, :, :, :, None] * pw[None, None, None, :, :]   # (K, Wp, Wo, Cin, Cout)
    b = jnp.transpose(b, (0, 1, 3, 2, 4))              # (K, Wp, Cin, Wo, Cout)
    return b.reshape(K, Wp * Cin, Wo * Cout)


def sepconv_pallas(xf, b, *, Ho, Wo, Cout, kernel_size, stride, row_tile=None):
    """xf: (N, Hp, Wp*Cin) folded padded input; b: (K, Wp*Cin, Wo*Cout)."""
    N, Hp, WpC = xf.shape
    K = kernel_size
    WoC = Wo * Cout
    tH = _pick_row_tile(Ho, row_tile)
    n_row_tiles = Ho // tH

    kernel = functools.partial(_sepconv_kernel, K=K, stride=stride, tH=tH, WoC=WoC)

    itemsize = jnp.dtype(xf.dtype).itemsize
    flops = 2 * N * K * Ho * WpC * WoC
    bytes_accessed = (xf.size + b.size + N * Ho * WoC) * itemsize

    return pl.pallas_call(
        kernel,
        out_shape=jax.ShapeDtypeStruct((N, Ho, WoC), xf.dtype),
        grid_spec=pltpu.PrefetchScalarGridSpec(
            num_scalar_prefetch=0,
            grid=(N, n_row_tiles),
            in_specs=[
                pl.BlockSpec((1, Hp, WpC), lambda n, r: (n, 0, 0)),
                pl.BlockSpec((K, WpC, WoC), lambda n, r: (0, 0, 0)),
            ],
            out_specs=pl.BlockSpec((1, tH, WoC), lambda n, r: (n, r, 0)),
        ),
        compiler_params=pltpu.CompilerParams(
            dimension_semantics=("parallel", "parallel"),
            vmem_limit_bytes=32 * 1024 * 1024,
        ),
        cost_estimate=pl.CostEstimate(
            flops=flops, transcendentals=0, bytes_accessed=bytes_accessed),
    )(xf, b)


def sepconv_forward(x_nchw, w_dw_torch, w_pw_torch, *, kernel_size, stride,
                    padding1=1, padding2=0, row_tile=None):
    """Matches SepConv.forward on NCHW input with PyTorch-layout weights.

    w_dw_torch: (Cin, 1, K, K)    (Conv2d groups=Cin weight)
    w_pw_torch: (Cout, Cin, 1, 1)
    """
    N, Cin, H, W = x_nchw.shape
    K = kernel_size
    Cout = w_pw_torch.shape[0]

    Hp, Wp = H + 2 * padding1, W + 2 * padding1
    Ho = (H + 2 * padding1 - K) // stride + 1
    Wo = (W + 2 * padding1 - K) // stride + 1

    # Boundary layout plumbing (NCHW interface -> lane-dense kernel layout).
    x_nhwc = jnp.transpose(x_nchw, (0, 2, 3, 1))
    xp = jnp.pad(x_nhwc, ((0, 0), (padding1, padding1), (padding1, padding1), (0, 0)))
    xf = xp.reshape(N, Hp, Wp * Cin)                      # fold W*Cin onto lanes

    dw = jnp.transpose(w_dw_torch[:, 0, :, :], (1, 2, 0))  # (K, K, Cin)
    pw = jnp.transpose(w_pw_torch[:, :, 0, 0], (1, 0))     # (Cin, Cout)
    b = _build_banded_weight(dw, pw, Wp=Wp, Wo=Wo, stride=stride)

    out_f = sepconv_pallas(xf, b, Ho=Ho, Wo=Wo, Cout=Cout,
                           kernel_size=K, stride=stride, row_tile=row_tile)

    out = out_f.reshape(N, Ho, Wo, Cout).transpose(0, 3, 1, 2)  # back to NCHW
    # padding2 on a 1x1 conv simply adds a zero border to the output (glue).
    if padding2 > 0:
        out = jnp.pad(out, ((0, 0), (0, 0), (padding2, padding2), (padding2, padding2)))
    return out


def _reference_nchw(x, w_dw, w_pw, *, stride, padding1, padding2):
    """Plain-JAX reference mirroring the PyTorch Sequential(conv_dw, conv_pw)."""
    Cin = x.shape[1]
    y = lax.conv_general_dilated(
        x, w_dw, window_strides=(stride, stride),
        padding=[(padding1, padding1), (padding1, padding1)],
        dimension_numbers=("NCHW", "OIHW", "NCHW"),
        feature_group_count=Cin,
    )
    y = lax.conv_general_dilated(
        y, w_pw, window_strides=(1, 1),
        padding=[(padding2, padding2), (padding2, padding2)],
        dimension_numbers=("NCHW", "OIHW", "NCHW"),
    )
    return y


if __name__ == "__main__":
    # SepConv(in_ch=4, out_ch=8, kernel_size=3, stride=1, padding1=1, padding2=0)
    in_ch, out_ch, K, stride, p1, p2 = 4, 8, 3, 1, 1, 0
    N, H, W = 2, 16, 16

    key = jax.random.PRNGKey(0)
    kx, kdw, kpw = jax.random.split(key, 3)
    x = jax.random.normal(kx, (N, in_ch, H, W), dtype=jnp.float32)
    # Deterministic synthetic weights (PyTorch Conv2d weight layouts).
    w_dw = 0.1 * jax.random.normal(kdw, (in_ch, 1, K, K), dtype=jnp.float32)
    w_pw = 0.1 * jax.random.normal(kpw, (out_ch, in_ch, 1, 1), dtype=jnp.float32)

    # row_tile=8 exercises the (batch, row-tile) 2-D grid at this small size.
    out = sepconv_forward(x, w_dw, w_pw, kernel_size=K, stride=stride,
                          padding1=p1, padding2=p2, row_tile=8)
    out = jax.block_until_ready(out)

    ref = _reference_nchw(x, w_dw, w_pw, stride=stride, padding1=p1, padding2=p2)
    assert out.shape == ref.shape, (out.shape, ref.shape)
    assert jnp.allclose(out, ref, atol=1e-4, rtol=1e-4), float(jnp.max(jnp.abs(out - ref)))

    print("KERNEL_OK")
</pallas_src>

<mosaic_0001>
module attributes {stable_mosaic.version = 11 : i64} {
  func.func @_sepconv_kernel(%arg0: i32, %arg1: i32, %arg2: memref<1x18x72xf32, #tpu.memory_space<vmem>>, %arg3: memref<3x72x128xf32, #tpu.memory_space<vmem>>, %arg4: memref<1x8x128xf32, #tpu.memory_space<vmem>>) attributes {dimension_semantics = [#tpu.dimension_semantics<parallel>, #tpu.dimension_semantics<parallel>], iteration_bounds = array<i64: 2, 2>, scalar_prefetch = 0 : i64, scratch_operands = 0 : i64, tpu.core_type = #tpu.core_type<tc>, window_params = [{transform_indices = @transform_0, window_bounds = array<i64: 1, 18, 72>}, {pipeline_mode = #tpu.pipeline_mode<synchronous>, transform_indices = @transform_1, window_bounds = array<i64: 3, 72, 128>}, {transform_indices = @transform_2, window_bounds = array<i64: 1, 8, 128>}]} {
    %c8_i32 = arith.constant 8 : i32
    %0 = arith.muli %arg1, %c8_i32 : i32
    %1 = tpu.assume_multiple %0, 8 : i32
    %cst = arith.constant 0.000000e+00 : f32
    %2 = vector.broadcast %cst : f32 to vector<8x128xf32>
    %c0_i32 = arith.constant 0 : i32
    %3 = arith.addi %1, %c0_i32 : i32
    %c0 = arith.constant 0 : index
    %4 = arith.index_cast %3 : i32 to index
    %c0_0 = arith.constant 0 : index
    %5 = vector.load %arg2[%c0, %4, %c0_0] : memref<1x18x72xf32, #tpu.memory_space<vmem>>, vector<1x8x72xf32>
    %6 = vector.shape_cast %5 : vector<1x8x72xf32> to vector<8x72xf32>
    %c0_1 = arith.constant 0 : index
    %c0_2 = arith.constant 0 : index
    %c0_3 = arith.constant 0 : index
    %7 = vector.load %arg3[%c0_1, %c0_2, %c0_3] : memref<3x72x128xf32, #tpu.memory_space<vmem>>, vector<1x72x128xf32>
    %8 = vector.shape_cast %7 : vector<1x72x128xf32> to vector<72x128xf32>
    %cst_4 = arith.constant dense<0.000000e+00> : vector<8x128xf32>
    %9 = tpu.matmul %6, %8, %cst_4 {dimension_numbers = #tpu.dot_dimension_numbers<[1], [0], [0], [1], [0, 0, 1, 1], [], []>} : vector<8x72xf32>, vector<72x128xf32>, vector<8x128xf32> -> vector<8x128xf32>
    %10 = arith.addf %2, %9 : vector<8x128xf32>
    %c1_i32 = arith.constant 1 : i32
    %11 = arith.addi %1, %c1_i32 : i32
    %c0_5 = arith.constant 0 : index
    %12 = arith.index_cast %11 : i32 to index
    %c0_6 = arith.constant 0 : index
    %13 = vector.load %arg2[%c0_5, %12, %c0_6] : memref<1x18x72xf32, #tpu.memory_space<vmem>>, vector<1x8x72xf32>
    %14 = vector.shape_cast %13 : vector<1x8x72xf32> to vector<8x72xf32>
    %c1 = arith.constant 1 : index
    %c0_7 = arith.constant 0 : index
    %c0_8 = arith.constant 0 : index
    %15 = vector.load %arg3[%c1, %c0_7, %c0_8] : memref<3x72x128xf32, #tpu.memory_space<vmem>>, vector<1x72x128xf32>
    %16 = vector.shape_cast %15 : vector<1x72x128xf32> to vector<72x128xf32>
    %cst_9 = arith.constant dense<0.000000e+00> : vector<8x128xf32>
    %17 = tpu.matmul %14, %16, %cst_9 {dimension_numbers = #tpu.dot_dimension_numbers<[1], [0], [0], [1], [0, 0, 1, 1], [], []>} : vector<8x72xf32>, vector<72x128xf32>, vector<8x128xf32> -> vector<8x128xf32>
    %18 = arith.addf %10, %17 : vector<8x128xf32>
    %c2_i32 = arith.constant 2 : i32
    %19 = arith.addi %1, %c2_i32 : i32
    %c0_10 = arith.constant 0 : index
    %20 = arith.index_cast %19 : i32 to index
    %c0_11 = arith.constant 0 : index
    %21 = vector.load %arg2[%c0_10, %20, %c0_11] : memref<1x18x72xf32, #tpu.memory_space<vmem>>, vector<1x8x72xf32>
    %22 = vector.shape_cast %21 : vector<1x8x72xf32> to vector<8x72xf32>
    %c2 = arith.constant 2 : index
    %c0_12 = arith.constant 0 : index
    %c0_13 = arith.constant 0 : index
    %23 = vector.load %arg3[%c2, %c0_12, %c0_13] : memref<3x72x128xf32, #tpu.memory_space<vmem>>, vector<1x72x128xf32>
    %24 = vector.shape_cast %23 : vector<1x72x128xf32> to vector<72x128xf32>
    %cst_14 = arith.constant dense<0.000000e+00> : vector<8x128xf32>
    %25 = tpu.matmul %22, %24, %cst_14 {dimension_numbers = #tpu.dot_dimension_numbers<[1], [0], [0], [1], [0, 0, 1, 1], [], []>} : vector<8x72xf32>, vector<72x128xf32>, vector<8x128xf32> -> vector<8x128xf32>
    %26 = arith.addf %18, %25 : vector<8x128xf32>
    %27 = vector.shape_cast %26 : vector<8x128xf32> to vector<1x8x128xf32>
    %c0_15 = arith.constant 0 : index
    %c0_16 = arith.constant 0 : index
    %c0_17 = arith.constant 0 : index
    %28 = vector.load %arg4[%c0_15, %c0_16, %c0_17] : memref<1x8x128xf32, #tpu.memory_space<vmem>>, vector<1x8x128xf32>
    tpu.vector_store %arg4[%c0_15, %c0_16, %c0_17], %27 {strides = array<i32>} : memref<1x8x128xf32, #tpu.memory_space<vmem>>, vector<1x8x128xf32>,
    return
  }
  func.func @transform_0(%arg0: i32, %arg1: i32) -> (i32, i32, i32) {
    %c0_i32 = arith.constant 0 : i32
    %c0_i32_0 = arith.constant 0 : i32
    %c0_i32_1 = arith.constant 0 : i32
    return %arg0, %c0_i32, %c0_i32_0 : i32, i32, i32
  }
  func.func @transform_1(%arg0: i32, %arg1: i32) -> (i32, i32, i32) {
    %c0_i32 = arith.constant 0 : i32
    %c0_i32_0 = arith.constant 0 : i32
    %c0_i32_1 = arith.constant 0 : i32
    %c0_i32_2 = arith.constant 0 : i32
    return %c0_i32, %c0_i32_0, %c0_i32_1 : i32, i32, i32
  }
  func.func @transform_2(%arg0: i32, %arg1: i32) -> (i32, i32, i32) {
    %c0_i32 = arith.constant 0 : i32
    %c0_i32_0 = arith.constant 0 : i32
    return %arg0, %arg1, %c0_i32 : i32, i32, i32
  }
}

</mosaic_0001>

<llo_original>
// kernel: tpu_custom_call.1
$region0: #{tpu_custom_call.1}
  #allocation0 [shape = 'u32[]', space=smem, size = 0x4, offset = 0x4, fixed_abs, tag = 'smem constant byte address 0x4 - core index']
  #allocation1 [shape = 'u32[72,128]{1,0:T(1,128)}', space=vmem, size = 0x9000, scoped, tag = 'internal scratch']
  %s0 = inlined_call_operand.vmem [shape: f32[2,18,72], index: 0, kind: input, shape index: {}]
  %s1 = inlined_call_operand.hbm [shape: f32[3,72,128], index: 1, kind: input, shape index: {}]
  %s2 = inlined_call_operand.hbm [shape: f32[2,16,128], index: 2, kind: output, shape index: {}]
  %s3 = sld [smem:[#allocation0]]
  $region45: #{tpu_custom_call.1} parent=0
    _
  %s5 = ssub.s32 1, %s3
  %s6 = scalar_select 0, %s5, %s3
  $region1: #{tpu_custom_call.1} parent=0
    #allocation2 [shape = 'u8[110592]{0}', space=vmem, size = 0x1b000, scoped, tag = 'input window, operand 1, single buffered']
    #allocation3 [shape = 's32[2]{0}', space=sflag, size = 0x8, scoped, tag = 'scoped memory for tpu_custom_call.1']
    #allocation4 [shape = 's32[2]{0}', space=sflag, size = 0x8, scoped, tag = 'scoped memory for tpu_custom_call.1']
    #allocation5 [shape = 'u8[8192]{0}', space=vmem, size = 0x2000, scoped, tag = 'output window, operand 0']
    %7 = vsyncpa [#allocation3], 0
    %8 = vsyncpa [#allocation4], 0
    %s9 = scalar_lea.sflag [#allocation4], 1
    %10 = vsyncpa %s9, 0
    loop: start=0, step=1, limit=6
    $region2: #{tpu_custom_call.1} parent=1 // loop_pre_header
      _
    $region3: #{tpu_custom_call.1} parent=1 // loop_header
      %s12 = sphi 0, %s16
      %p13 = scmp.ge.s32.totalorder %s12, 6
      %s19 = sphi 0, %s31
      %s20 = sphi 0, %s27
      %s21 = sphi 0, %s19
      %s22 = sphi 0, %s20
      %s23 = sphi 0, %s21
      %s24 = sphi 0, %s22
      %s34 = sphi 0, %s36
      %s37 = sphi 0, %s34
      %s38 = sphi 0, %s37
      %s54 = sphi 0, %s38
      %s58 = sphi 0, %s58
      %s60 = sphi 0, %s58
      %s61 = sphi 0, %s60
      %s75 = sphi 0, %s61
      %s83 = sphi 0, %s85
      %s86 = sphi 0, %s83
      %s87 = sphi 0, %s86
      %s103 = sphi 0, %s87
    $region4: #{tpu_custom_call.1} parent=1 // loop_header_branch
      %15 = sbr.rel (%p13) target = $region8
    $region5: #{tpu_custom_call.1} parent=1 // loop_body
      %s17 = ssub.s32 %s12, 1
      %s18 = ssub.s32 %s12, 2
      %s25 = sadd.s32 1, %s20
      %p26 = scmp.ge.s32.totalorder %s25, 2
      %s27 = scalar_select %p26, 0, %s25
      %s28 = sadd.s32 1, %s19
      %s29 = scalar_select %p26, %s28, %s19
      %p30 = scmp.ge.s32.totalorder %s29, 2
      %s31 = scalar_select %p30, 0, %s29
      %s32 = ssub.s32 %s19, %s31
      %p33 = scmp.eq.s32.totalorder %s32, 0
      %s35 = sadd.s32 %s34, 1
      %s36 = scalar_select %p33, %s34, %s35
      %p39 = pneg %p33
      %p40 = scmp.eq.s32.totalorder %s12, 3
      %p41 = por %p39, %p40
      %p42 = scmp.ne.s32.totalorder %s34, %s37
      %p43 = scmp.eq.s32.totalorder %s12, 0
      %p44 = por %p42, %p43
      %p45 = scmp.ne.s32.totalorder %s34, %s37
      %p46 = scmp.eq.s32.totalorder %s17, 3
      %p47 = por %p45, %p46
      %p48 = scmp.ne.s32.totalorder %s37, %s38
      %p49 = scmp.eq.s32.totalorder %s17, 0
      %p50 = por %p48, %p49
      %p51 = scmp.ne.s32.totalorder %s37, %s38
      %p52 = scmp.eq.s32.totalorder %s18, 3
      %p53 = por %p51, %p52
      %p55 = scmp.ne.s32.totalorder %s38, %s54
      %p56 = scmp.eq.s32.totalorder %s18, 0
      %p57 = por %p55, %p56
      %s59 = sadd.s32 %s58, 1
      %p62 = scmp.eq.s32.totalorder %s12, 3
      %p63 = scmp.ne.s32.totalorder %s58, %s60
      %p64 = scmp.eq.s32.totalorder %s12, 0
      %p65 = por %p63, %p64
      %p66 = scmp.ne.s32.totalorder %s58, %s60
      %p67 = scmp.eq.s32.totalorder %s17, 3
      %p68 = por %p66, %p67
      %p69 = scmp.ne.s32.totalorder %s60, %s61
      %p70 = scmp.eq.s32.totalorder %s17, 0
      %p71 = por %p69, %p70
      %p72 = scmp.ne.s32.totalorder %s60, %s61
      %p73 = scmp.eq.s32.totalorder %s18, 3
      %p74 = por %p72, %p73
      %p76 = scmp.ne.s32.totalorder %s61, %s75
      %p77 = scmp.eq.s32.totalorder %s18, 0
      %p78 = por %p76, %p77
      %s79 = ssub.s32 %s19, %s31
      %s80 = ssub.s32 %s20, %s27
      %s81 = sor.u32 %s79, %s80
      %p82 = scmp.eq.s32.totalorder %s81, 0
      %s84 = sadd.s32 %s83, 1
      %s85 = scalar_select %p82, %s83, %s84
      %p88 = pneg %p82
      %p89 = scmp.eq.s32.totalorder %s12, 3
      %p90 = por %p88, %p89
      %p91 = scmp.ne.s32.totalorder %s83, %s86
      %p92 = scmp.eq.s32.totalorder %s12, 0
      %p93 = por %p91, %p92
      %p94 = scmp.ne.s32.totalorder %s83, %s86
      %p95 = scmp.eq.s32.totalorder %s17, 3
      %p96 = por %p94, %p95
      %p97 = scmp.ne.s32.totalorder %s86, %s87
      %p98 = scmp.eq.s32.totalorder %s17, 0
      %p99 = por %p97, %p98
      %p100 = scmp.ne.s32.totalorder %s86, %s87
      %p101 = scmp.eq.s32.totalorder %s18, 3
      %p102 = por %p100, %p101
      %p104 = scmp.ne.s32.totalorder %s87, %s103
      %p105 = scmp.eq.s32.totalorder %s18, 0
      %p106 = por %p104, %p105
      %p107 = scmp.le.s32.totalorder 1, %s12
      %p108 = scmp.lt.s32.totalorder %s12, 5
      %p109 = pnand %p107, %p108
      %p110 = pneg %p109
      // Predicated region
      $region9: #{tpu_custom_call.1} parent=5 // pred_check
        _
      $region10: #{tpu_custom_call.1} parent=5 // pred_check_branch
        %112 = sbr.rel (%p109) target = $region12
      $region11: #{tpu_custom_call.1} parent=5 // pred_region
        %s113 = ssub.s32 %s12, 1
        // Predicated region
        $region13: #{tpu_custom_call.1} parent=11 // pred_check
          %p114 = pneg %p71
        $region14: #{tpu_custom_call.1} parent=11 // pred_check_branch
          %116 = sbr.rel (%p114) target = $region16
        $region15: #{tpu_custom_call.1} parent=11 // pred_region
          %118 = vsyncadd [#allocation3], 0
          %s119 = sshll.u32 %s1, 4
          %s120 = int_to_ptr.hbm [resolvable:$true] %s119
          %s121 = sshll.u32 [#allocation2], 4
          %s122 = int_to_ptr.vmem [resolvable:$true] %s121
          %127 = dma.hbm_to_vmem [thread:$0]  %s120, 3456, %s122, [#allocation3], 128, 128, 8
        $region16: #{tpu_custom_call.1} parent=11 // pred_fallthru
          _
      $region12: #{tpu_custom_call.1} parent=5 // pred_fallthru
        _
      %p128 = scmp.lt.s32.totalorder %s12, 4
      // Predicated region
      $region17: #{tpu_custom_call.1} parent=5 // pred_check
        %p129 = pneg %p128
      $region18: #{tpu_custom_call.1} parent=5 // pred_check_branch
        %131 = sbr.rel (%p129) target = $region20
      $region19: #{tpu_custom_call.1} parent=5 // pred_region
        // Predicated region
        $region21: #{tpu_custom_call.1} parent=19 // pred_check
          %p132 = pneg %p44
        $region22: #{tpu_custom_call.1} parent=19 // pred_check_branch
          %134 = sbr.rel (%p132) target = $region24
        $region23: #{tpu_custom_call.1} parent=19 // pred_region
          %p135 = scmp.lt.s32.totalorder %s19, 1
          %s136 = scalar_select %p135, %s19, 1
          %s137 = smul.addr %s136, 3
          %s138 = smul.addr %s137, 8
          %s139 = scalar_lea.vmem %s0, %s138
        $region24: #{tpu_custom_call.1} parent=19 // pred_fallthru
          _
      $region20: #{tpu_custom_call.1} parent=5 // pred_fallthru
        _
      %p140 = scmp.le.s32.totalorder 1, %s12
      %p141 = scmp.lt.s32.totalorder %s12, 5
      %p142 = pnand %p140, %p141
      %p143 = pneg %p142
      // Predicated region
      $region25: #{tpu_custom_call.1} parent=5 // pred_check
        _
      $region26: #{tpu_custom_call.1} parent=5 // pred_check_branch
        %145 = sbr.rel (%p142) target = $region28
      $region27: #{tpu_custom_call.1} parent=5 // pred_region
        %s146 = ssub.s32 %s12, 1
        // Predicated region
        $region29: #{tpu_custom_call.1} parent=27 // pred_check
          %p147 = pneg %p71
        $region30: #{tpu_custom_call.1} parent=27 // pred_check_branch
          %149 = sbr.rel (%p147) target = $region32
        $region31: #{tpu_custom_call.1} parent=27 // pred_region
          %151 = dma.done [#allocation3], 3456
        $region32: #{tpu_custom_call.1} parent=27 // pred_fallthru
          _
        %p152 = scmp.lt.s32.totalorder %s21, 1
        %s153 = scalar_select %p152, %s21, 1
        %s154 = smul.addr %s153, 3
        %s155 = smul.addr %s154, 8
        %s156 = scalar_lea.vmem %s0, %s155
        %p157 = pneg %p50
        %p158 = pneg %p47
        %p159 = pneg %p71
        %p160 = pneg %p68
        %p161 = pneg %p99
        %p162 = pneg %p96
        %s163 = sand.u32 %s86, 1
        %s164 = scalar_lea.sflag [#allocation4], %s163
        %s165 = sand.u32 %s86, 1
        %s166 = smul.addr %s165, 8
        %s167 = scalar_lea.vmem [#allocation5], %s166
        %p168 = scmp.lt.s32.totalorder %s21, 1
        %s169 = scalar_select %p168, %s21, 1
        %s170 = smul.addr %s169, 3
        %s171 = smul.addr %s170, 8
        %s172 = scalar_lea.vmem %s0, %s171
        %s173 = smul.u32 %s22, 8
        %s174 = scalar_lea.vmem %s172, %s173
        %v175 = vld [vmem:[%s174] sm:$0xff]
        %v176 = vld [vmem:[#allocation2] sm:$0xff]
        %v177 = vld [vmem:[#allocation2 + $0x8] sm:$0xff]
        %v178 = vld [vmem:[#allocation2 + $0x10] sm:$0xff]
        %v179 = vld [vmem:[#allocation2 + $0x18] sm:$0xff]
        %v180 = vld [vmem:[#allocation2 + $0x20] sm:$0xff]
        %v181 = vld [vmem:[#allocation2 + $0x28] sm:$0xff]
        %v182 = vld [vmem:[#allocation2 + $0x30] sm:$0xff]
        %v183 = vld [vmem:[#allocation2 + $0x38] sm:$0xff]
        %v184 = vld [vmem:[#allocation2 + $0x40] sm:$0xff]
        %s185 = sadd.s32 %s173, 1
        %s186 = scalar_lea.vmem %s172, %s185
        %v187 = vld [vmem:[%s186] sm:$0xff]
        %s188 = scalar_lea.vmem [#allocation2], 72
        %v189 = vld [vmem:[%s188] sm:$0xff]
        %v190 = vld [vmem:[%s188 + $0x8] sm:$0xff]
        %v191 = vld [vmem:[%s188 + $0x10] sm:$0xff]
        %v192 = vld [vmem:[%s188 + $0x18] sm:$0xff]
        %v193 = vld [vmem:[%s188 + $0x20] sm:$0xff]
        %v194 = vld [vmem:[%s188 + $0x28] sm:$0xff]
        %v195 = vld [vmem:[%s188 + $0x30] sm:$0xff]
        %v196 = vld [vmem:[%s188 + $0x38] sm:$0xff]
        %v197 = vld [vmem:[%s188 + $0x40] sm:$0xff]
        %vm198 = vcmask 588800
        %v200 = vsel %vm198, %v187, 0
        %202 = vmatpush.msra.mxu0 0.0
        %203 = vmatpush.msra.mxu0 0.0
        %204 = vmatpush.msra.mxu0 0.0
        %205 = vmatpush.msra.mxu0 0.0
        %206 = vmatpush.msra.mxu0 0.0
        %207 = vmatpush.msra.mxu0 0.0
        %208 = vmatpush.msra.mxu0 0.0
        %209 = vmatpush.msra.mxu0 %v197
        %210 = vmatpush.msra.mxu0 %v196
        %211 = vmatpush.msra.mxu0 %v195
        %212 = vmatpush.msra.mxu0 %v194
        %213 = vmatpush.msra.mxu0 %v193
        %214 = vmatpush.msra.mxu0 %v192
        %215 = vmatpush.msra.mxu0 %v191
        %216 = vmatpush.msra.mxu0 %v190
        %217 = vmatpush.msra.mxu0 %v189
        %218 = vmatmul.f32.gmra.mxu0 %v200
        %v219 = vpop.f32.mrf.mxu0
        %v220 = vadd.f32 0.0, %v219
        %221 = vdwg.mxu0
        %v223 = vsel %vm198, %v175, 0
        %225 = vmatpush.msra.mxu0 0.0
        %226 = vmatpush.msra.mxu0 0.0
        %227 = vmatpush.msra.mxu0 0.0
        %228 = vmatpush.msra.mxu0 0.0
        %229 = vmatpush.msra.mxu0 0.0
        %230 = vmatpush.msra.mxu0 0.0
        %231 = vmatpush.msra.mxu0 0.0
        %232 = vmatpush.msra.mxu0 %v184
        %233 = vmatpush.msra.mxu0 %v183
        %234 = vmatpush.msra.mxu0 %v182
        %235 = vmatpush.msra.mxu0 %v181
        %236 = vmatpush.msra.mxu0 %v180
        %237 = vmatpush.msra.mxu0 %v179
        %238 = vmatpush.msra.mxu0 %v178
        %239 = vmatpush.msra.mxu0 %v177
        %240 = vmatpush.msra.mxu0 %v176
        %241 = vmatmul.f32.gmra.mxu0 %v223
        %v242 = vpop.f32.mrf.mxu0
        %v243 = vadd.f32 %v220, %v242
        %244 = vdwg.mxu0
        %s245 = sadd.s32 %s173, 2
        %s246 = scalar_lea.vmem %s172, %s245
        %v247 = vld [vmem:[%s246] sm:$0xff]
        %s248 = scalar_lea.vmem [#allocation2], 144
        %v249 = vld [vmem:[%s248] sm:$0xff]
        %v250 = vld [vmem:[%s248 + $0x8] sm:$0xff]
        %v251 = vld [vmem:[%s248 + $0x10] sm:$0xff]
        %v252 = vld [vmem:[%s248 + $0x18] sm:$0xff]
        %v253 = vld [vmem:[%s248 + $0x20] sm:$0xff]
        %v254 = vld [vmem:[%s248 + $0x28] sm:$0xff]
        %v255 = vld [vmem:[%s248 + $0x30] sm:$0xff]
        %v256 = vld [vmem:[%s248 + $0x38] sm:$0xff]
        %v257 = vld [vmem:[%s248 + $0x40] sm:$0xff]
        %v259 = vsel %vm198, %v247, 0
        %261 = vmatpush.msra.mxu0 0.0
        %262 = vmatpush.msra.mxu0 0.0
        %263 = vmatpush.msra.mxu0 0.0
        %264 = vmatpush.msra.mxu0 0.0
        %265 = vmatpush.msra.mxu0 0.0
        %266 = vmatpush.msra.mxu0 0.0
        %267 = vmatpush.msra.mxu0 0.0
        %268 = vmatpush.msra.mxu0 %v257
        %269 = vmatpush.msra.mxu0 %v256
        %270 = vmatpush.msra.mxu0 %v255
        %271 = vmatpush.msra.mxu0 %v254
        %272 = vmatpush.msra.mxu0 %v253
        %273 = vmatpush.msra.mxu0 %v252
        %274 = vmatpush.msra.mxu0 %v251
        %275 = vmatpush.msra.mxu0 %v250
        %276 = vmatpush.msra.mxu0 %v249
        %277 = vmatmul.f32.gmra.mxu0 %v259
        %v278 = vpop.f32.mrf.mxu0
        %v279 = vadd.f32 0.0, %v278
        %280 = vdwg.mxu0
        %v281 = vadd.f32 %v243, %v279
        %282 = vst [vmem:[%s167] sm:$0xff] %v281
        %s283 = sand.u32 %s86, 1
        %s284 = scalar_lea.sflag [#allocation4], %s283
        %s285 = sand.u32 %s86, 1
        %s286 = smul.addr %s285, 8
        %s287 = scalar_lea.vmem [#allocation5], %s286
        // Predicated region
        $region33: #{tpu_custom_call.1} parent=27 // pred_check
          %p288 = pneg %p96
        $region34: #{tpu_custom_call.1} parent=27 // pred_check_branch
          %290 = sbr.rel (%p288) target = $region36
        $region35: #{tpu_custom_call.1} parent=27 // pred_region
          %292 = vsyncadd %s284, 0
          %s293 = smul.addr %s21, 2
          %s294 = sadd.s32 %s22, %s293
          %s295 = smul.addr %s294, 8
          %s296 = scalar_lea.hbm %s2, %s295
          %s298 = sshll.u32 %s287, 4
          %s299 = int_to_ptr.vmem [resolvable:$true] %s298
          %s300 = sshll.u32 %s296, 4
          %s301 = int_to_ptr.hbm [resolvable:$true] %s300
          %303 = dma.vmem_to_hbm [thread:$0]  %s299, 128, %s301, %s284
        $region36: #{tpu_custom_call.1} parent=27 // pred_fallthru
          _
      $region28: #{tpu_custom_call.1} parent=5 // pred_fallthru
        _
      %p304 = scmp.le.s32.totalorder 2, %s12
      // Predicated region
      $region37: #{tpu_custom_call.1} parent=5 // pred_check
        %p305 = pneg %p304
      $region38: #{tpu_custom_call.1} parent=5 // pred_check_branch
        %307 = sbr.rel (%p305) target = $region40
      $region39: #{tpu_custom_call.1} parent=5 // pred_region
        %s308 = ssub.s32 %s12, 2
        // Predicated region
        $region41: #{tpu_custom_call.1} parent=39 // pred_check
          %p309 = pneg %p102
        $region42: #{tpu_custom_call.1} parent=39 // pred_check_branch
          %311 = sbr.rel (%p309) target = $region44
        $region43: #{tpu_custom_call.1} parent=39 // pred_region
          %s312 = sand.u32 %s87, 1
          %s313 = scalar_lea.sflag [#allocation4], %s312
          %s314 = sand.u32 %s87, 1
          %s315 = smul.addr %s314, 8
          %s316 = scalar_lea.vmem [#allocation5], %s315
          %318 = dma.done %s313, 128
        $region44: #{tpu_custom_call.1} parent=39 // pred_fallthru
          _
      $region40: #{tpu_custom_call.1} parent=5 // pred_fallthru
        _
    $region6: #{tpu_custom_call.1} parent=1 // loop_footer
      %s16 = sadd.s32 1, %s12
    $region7: #{tpu_custom_call.1} parent=1 // loop_footer_branch
      %11 = sbr.rel target = $region3
    $region8: #{tpu_custom_call.1} parent=1 // loop_exit
      _
    %319 = vsyncpa [#allocation3], 1
    %s320 = scalar_lea.sflag [#allocation3], 1
    %321 = vsyncpa %s320, 1
    %322 = vsyncpa [#allocation4], 1
    %s323 = scalar_lea.sflag [#allocation4], 1
    %324 = vsyncpa %s323, 1

</llo_original>
